<compile_context>
chip_gen: v6e
topology: v6e:2x2x1
jax: 0.10.0
libtpu: 0.0.40
codegen_flags: <defaults>
</compile_context>

<pallas_src>
import functools

import jax
import jax.numpy as jnp
from jax.experimental import pallas as pl
from jax.experimental.pallas import tpu as pltpu


# ----------------------------------------------------------------------------
# Kernels
# ----------------------------------------------------------------------------
def _scse_apply_kernel(ws_ref, e_ref, u_ref, out_ref):
    # ws_ref : (C, 1)    f32   sSE 1x1x1 conv weight (pre-laid-out column)
    # e_ref  : (1, C, 1) f32   precomputed cSE channel gate for this batch elem
    # u_ref  : (1, C, T)       input tile ; out_ref: same shape
    u = u_ref[0]                                              # (C, T) native
    uf = u.astype(jnp.float32)

    # sSE: per-position channel reduction (VPU mul + sublane reduce), f32 acc.
    q = jax.nn.sigmoid(jnp.sum(uf * ws_ref[...], axis=0, keepdims=True))  # (1,T)

    # Combine gates (broadcast (C,1)+(1,T)) and apply.
    gate = e_ref[0] + q                                       # (C, T) f32
    out_ref[0] = (uf * gate).astype(out_ref.dtype)


def _scse_fused_kernel(ws_ref, wsqt_ref, wex_ref, u_ref, out_ref):
    # Single-pass per batch element: z, channel gate, spatial gate, apply.
    # ws_ref  : (C, 1)     f32
    # wsqt_ref: (C, C//2)  f32   Conv_Squeeze weight, transposed
    # wex_ref : (C, C//2)  f32   Conv_Excitation weight
    # u_ref   : (1, C, S)        full spatial slab ; out_ref: same shape
    u = u_ref[0]                                              # (C, S) native
    uf = u.astype(jnp.float32)

    # cSE: z = mean over S (lane reduce), then two tiny projections on the VPU.
    z_col = jnp.mean(uf, axis=1, keepdims=True)               # (C, 1)
    h_row = jnp.sum(wsqt_ref[...] * z_col, axis=0, keepdims=True)      # (1, C//2)
    e_col = jax.nn.sigmoid(
        jnp.sum(wex_ref[...] * h_row, axis=1, keepdims=True))          # (C, 1)

    # sSE: per-position channel reduction (sublane reduce).
    q_row = jax.nn.sigmoid(jnp.sum(uf * ws_ref[...], axis=0, keepdims=True))  # (1, S)

    out_ref[0] = (uf * (e_col + q_row)).astype(out_ref.dtype)


# ----------------------------------------------------------------------------
# Wrapper
# ----------------------------------------------------------------------------
def _vmem_budget_bytes():
    """(vmem_capacity, pipeline_budget) — generation-aware, conservative."""
    cap = 64 << 20  # safe default = smallest per-core VMEM (v7x)
    try:
        info = pltpu.get_tpu_info()
        cap = int(getattr(info, "vmem_capacity_bytes", cap)) or cap
    except Exception:
        pass
    budget = cap // 3                 # v7x ~21 MiB, v5e/v6e ~42 MiB
    return cap, max(16 << 20, min(budget, 48 << 20))


@functools.partial(jax.jit, static_argnames=("force_streamed",))
def scse_forward(u_ncdhw, w_sse, w_sq, w_ex, *, force_streamed=False):
    """u_ncdhw: (N, C, D, H, W).  Weights (1x1x1 convs, bias=False, squeezed):
       w_sse: (1, C)      sSE Conv3d(C, 1, 1)
       w_sq : (C//2, C)   cSE Conv_Squeeze
       w_ex : (C, C//2)   cSE Conv_Excitation
    """
    N, C, D, H, W = u_ncdhw.shape
    S = D * H * W
    itemsize = jnp.dtype(u_ncdhw.dtype).itemsize
    u = u_ncdhw.reshape(N, C, S)

    # Loop-invariant gate vectors, laid out once in XLA (no per-tile relayout).
    ws_col = w_sse.astype(jnp.float32).reshape(C, 1)          # (C, 1)
    w_sq_t = w_sq.astype(jnp.float32).T                       # (C, C//2)
    w_ex_f = w_ex.astype(jnp.float32)                         # (C, C//2)

    vmem_cap, budget = _vmem_budget_bytes()
    LANE = 128

    # ---------------- fused single-pass path (2x HBM traffic) ----------------
    fused_need = 4 * C * S * itemsize + 3 * C * S * 4         # dbl-buf io + f32 temps
    if (not force_streamed) and fused_need <= budget:
        vmem_limit = int(min(max(fused_need + (2 << 20), 16 << 20),
                             vmem_cap * 3 // 4))
        cost = pl.CostEstimate(
            flops=int(6 * N * C * S),
            transcendentals=int(N * (S + C + C // 2)),
            bytes_accessed=int(2 * N * C * S * itemsize))
        out = pl.pallas_call(
            _scse_fused_kernel,
            out_shape=jax.ShapeDtypeStruct((N, C, S), u_ncdhw.dtype),
            grid_spec=pltpu.PrefetchScalarGridSpec(
                num_scalar_prefetch=0,
                grid=(N,),
                in_specs=[
                    pl.BlockSpec((C, 1), lambda n: (0, 0)),
                    pl.BlockSpec((C, C // 2), lambda n: (0, 0)),
                    pl.BlockSpec((C, C // 2), lambda n: (0, 0)),
                    pl.BlockSpec((1, C, S), lambda n: (n, 0, 0)),
                ],
                out_specs=pl.BlockSpec((1, C, S), lambda n: (n, 0, 0)),
            ),
            compiler_params=pltpu.CompilerParams(
                dimension_semantics=("parallel",),
                vmem_limit_bytes=vmem_limit,
            ),
            cost_estimate=cost,
        )(ws_col, w_sq_t, w_ex_f, u)
        return out.reshape(N, C, D, H, W)

    # ---------------- streamed path (scales to any volume) -------------------
    # Channel gate e (tiny, O(N*C)) in plain XLA, f32 accumulation; costs one
    # extra HBM read of U but never needs a full slab resident in VMEM.
    z = jnp.mean(u, axis=-1, dtype=jnp.float32)               # (N, C)
    h = z @ w_sq.astype(jnp.float32).T                        # (N, C//2)
    e = jax.nn.sigmoid(h @ w_ex.astype(jnp.float32).T)        # (N, C)
    e_col = e.reshape(N, C, 1)

    # Size TILE_S by bytes against the per-generation budget (lane-dense,
    # multiple of 128).  No padded copy of U: the last block is masked.
    s_aligned = -(-S // LANE) * LANE
    per_lane = C * (4 * itemsize + 3 * 4)   # dbl-buffered in+out + f32 temps
    tile = max(LANE, (budget // per_lane) // LANE * LANE)
    TILE_S = min(s_aligned, max(512, tile))
    num_s_tiles = -(-S // TILE_S)
    # Keep >= 2 parallel grid steps when possible (v7x has 2 TCs sharing the grid).
    while N * num_s_tiles < 2 and TILE_S > LANE:
        TILE_S = ((TILE_S // 2 + LANE - 1) // LANE) * LANE
        num_s_tiles = -(-S // TILE_S)

    io_bytes = 2 * 2 * C * TILE_S * itemsize
    tmp_bytes = 3 * C * TILE_S * 4
    vmem_limit = int(min(max(io_bytes + tmp_bytes + (2 << 20), 16 << 20),
                         vmem_cap * 3 // 4))

    cost = pl.CostEstimate(
        flops=int(5 * N * C * S),
        transcendentals=int(N * S),
        bytes_accessed=int(2 * N * C * S * itemsize))

    out = pl.pallas_call(
        _scse_apply_kernel,
        out_shape=jax.ShapeDtypeStruct((N, C, S), u_ncdhw.dtype),
        grid_spec=pltpu.PrefetchScalarGridSpec(
            num_scalar_prefetch=0,
            grid=(N, num_s_tiles),
            in_specs=[
                pl.BlockSpec((C, 1), lambda n, s: (0, 0)),             # ws
                pl.BlockSpec((1, C, 1), lambda n, s: (n, 0, 0)),       # e
                pl.BlockSpec((1, C, TILE_S), lambda n, s: (n, 0, s)),  # U tile
            ],
            out_specs=pl.BlockSpec((1, C, TILE_S), lambda n, s: (n, 0, s)),
        ),
        compiler_params=pltpu.CompilerParams(
            dimension_semantics=("parallel", "parallel"),
            vmem_limit_bytes=vmem_limit,
        ),
        cost_estimate=cost,
    )(ws_col, e_col, u)

    return out.reshape(N, C, D, H, W)


# ----------------------------------------------------------------------------
# Pure-JAX reference (mirrors the PyTorch forward exactly)
# ----------------------------------------------------------------------------
def _reference(u, w_sse, w_sq, w_ex):
    uf = u.astype(jnp.float32)
    # sSE
    q = jax.nn.sigmoid(jnp.einsum("oc,ncdhw->nodhw", w_sse, uf))   # (N,1,D,H,W)
    u_sse = uf * q
    # cSE
    z = jnp.mean(uf, axis=(2, 3, 4))                               # (N, C)
    h = jnp.einsum("oc,nc->no", w_sq, z)                           # (N, C//2)
    e = jax.nn.sigmoid(jnp.einsum("oc,nc->no", w_ex, h))           # (N, C)
    u_cse = uf * e[:, :, None, None, None]
    return (u_cse + u_sse).astype(u.dtype)


if __name__ == "__main__":
    key = jax.random.PRNGKey(0)
    k_u, k0, k1, k2, k_u2, k3, k4, k5 = jax.random.split(key, 8)

    # --- config 1: tile-aligned S (4*8*8 = 256), exercises fused + streamed ---
    N, C, D, H, W = 2, 4, 4, 8, 8
    U = jax.random.normal(k_u, (N, C, D, H, W), dtype=jnp.float32)
    w_sse = 0.5 * jax.random.normal(k0, (1, C), dtype=jnp.float32)
    w_sq = 0.5 * jax.random.normal(k1, (C // 2, C), dtype=jnp.float32)
    w_ex = 0.5 * jax.random.normal(k2, (C, C // 2), dtype=jnp.float32)

    ref = _reference(U, w_sse, w_sq, w_ex)

    out_fused = jax.block_until_ready(scse_forward(U, w_sse, w_sq, w_ex))
    assert out_fused.shape == U.shape
    assert jnp.allclose(out_fused, ref, atol=2e-5, rtol=2e-5), "fused mismatch"

    out_str = jax.block_until_ready(
        scse_forward(U, w_sse, w_sq, w_ex, force_streamed=True))
    assert jnp.allclose(out_str, ref, atol=2e-5, rtol=2e-5), "streamed mismatch"

    # --- config 2: S = 3*5*7 = 105 (not a 128 multiple) -> masked partial block
    Nb, Cb, Db, Hb, Wb = 1, 6, 3, 5, 7
    U2 = jax.random.normal(k_u2, (Nb, Cb, Db, Hb, Wb), dtype=jnp.float32)
    w_sse2 = 0.5 * jax.random.normal(k3, (1, Cb), dtype=jnp.float32)
    w_sq2 = 0.5 * jax.random.normal(k4, (Cb // 2, Cb), dtype=jnp.float32)
    w_ex2 = 0.5 * jax.random.normal(k5, (Cb, Cb // 2), dtype=jnp.float32)

    ref2 = _reference(U2, w_sse2, w_sq2, w_ex2)

    out2_fused = jax.block_until_ready(scse_forward(U2, w_sse2, w_sq2, w_ex2))
    assert jnp.allclose(out2_fused, ref2, atol=2e-5, rtol=2e-5), "fused-2 mismatch"

    out2_str = jax.block_until_ready(
        scse_forward(U2, w_sse2, w_sq2, w_ex2, force_streamed=True))
    assert jnp.allclose(out2_str, ref2, atol=2e-5, rtol=2e-5), "streamed-2 mismatch"

    print("KERNEL_OK")
</pallas_src>

<mosaic_0001>
module attributes {stable_mosaic.version = 11 : i64} {
  func.func @_scse_fused_kernel(%arg0: i32, %arg1: memref<4x1xf32, #tpu.memory_space<vmem>>, %arg2: memref<4x2xf32, #tpu.memory_space<vmem>>, %arg3: memref<4x2xf32, #tpu.memory_space<vmem>>, %arg4: memref<1x4x256xf32, #tpu.memory_space<vmem>>, %arg5: memref<1x4x256xf32, #tpu.memory_space<vmem>>) attributes {dimension_semantics = [#tpu.dimension_semantics<parallel>], iteration_bounds = array<i64: 2>, scalar_prefetch = 0 : i64, scratch_operands = 0 : i64, tpu.core_type = #tpu.core_type<tc>, window_params = [{pipeline_mode = #tpu.pipeline_mode<synchronous>, transform_indices = @transform_0, window_bounds = array<i64: 4, 1>}, {pipeline_mode = #tpu.pipeline_mode<synchronous>, transform_indices = @transform_1, window_bounds = array<i64: 4, 2>}, {pipeline_mode = #tpu.pipeline_mode<synchronous>, transform_indices = @transform_2, window_bounds = array<i64: 4, 2>}, {transform_indices = @transform_3, window_bounds = array<i64: 1, 4, 256>}, {transform_indices = @transform_4, window_bounds = array<i64: 1, 4, 256>}]} {
    %c0 = arith.constant 0 : index
    %c0_0 = arith.constant 0 : index
    %c0_1 = arith.constant 0 : index
    %0 = vector.load %arg4[%c0, %c0_0, %c0_1] : memref<1x4x256xf32, #tpu.memory_space<vmem>>, vector<1x4x256xf32>
    %1 = vector.shape_cast %0 : vector<1x4x256xf32> to vector<4x256xf32>
    %cst = arith.constant dense<0.000000e+00> : vector<4xf32>
    %2 = vector.multi_reduction <add>, %1, %cst [1] : vector<4x256xf32> to vector<4xf32>
    %3 = vector.shape_cast %2 : vector<4xf32> to vector<4x1xf32>
    %cst_2 = arith.constant 2.560000e+02 : f32
    %4 = vector.broadcast %cst_2 : f32 to vector<4x1xf32>
    %5 = arith.divf %3, %4 : vector<4x1xf32>
    %c0_3 = arith.constant 0 : index
    %c0_4 = arith.constant 0 : index
    %6 = vector.load %arg2[%c0_3, %c0_4] : memref<4x2xf32, #tpu.memory_space<vmem>>, vector<4x2xf32>
    %7 = vector.broadcast %5 : vector<4x1xf32> to vector<4x2xf32>
    %8 = arith.mulf %6, %7 : vector<4x2xf32>
    %cst_5 = arith.constant dense<0.000000e+00> : vector<2xf32>
    %9 = vector.multi_reduction <add>, %8, %cst_5 [0] : vector<4x2xf32> to vector<2xf32>
    %10 = vector.shape_cast %9 : vector<2xf32> to vector<1x2xf32>
    %c0_6 = arith.constant 0 : index
    %c0_7 = arith.constant 0 : index
    %11 = vector.load %arg3[%c0_6, %c0_7] : memref<4x2xf32, #tpu.memory_space<vmem>>, vector<4x2xf32>
    %12 = vector.broadcast %10 : vector<1x2xf32> to vector<4x2xf32>
    %13 = arith.mulf %11, %12 : vector<4x2xf32>
    %cst_8 = arith.constant dense<0.000000e+00> : vector<4xf32>
    %14 = vector.multi_reduction <add>, %13, %cst_8 [1] : vector<4x2xf32> to vector<4xf32>
    %15 = vector.shape_cast %14 : vector<4xf32> to vector<4x1xf32>
    %16 = arith.negf %15 : vector<4x1xf32>
    %17 = math.exp %16 : vector<4x1xf32>
    %cst_9 = arith.constant 1.000000e+00 : f32
    %18 = vector.broadcast %cst_9 : f32 to vector<4x1xf32>
    %19 = arith.addf %18, %17 : vector<4x1xf32>
    %20 = arith.divf %18, %19 : vector<4x1xf32>
    %c0_10 = arith.constant 0 : index
    %c0_11 = arith.constant 0 : index
    %21 = vector.load %arg1[%c0_10, %c0_11] : memref<4x1xf32, #tpu.memory_space<vmem>>, vector<4x1xf32>
    %22 = vector.broadcast %21 : vector<4x1xf32> to vector<4x256xf32>
    %23 = arith.mulf %1, %22 : vector<4x256xf32>
    %cst_12 = arith.constant dense<0.000000e+00> : vector<256xf32>
    %24 = vector.multi_reduction <add>, %23, %cst_12 [0] : vector<4x256xf32> to vector<256xf32>
    %25 = vector.shape_cast %24 : vector<256xf32> to vector<1x256xf32>
    %26 = arith.negf %25 : vector<1x256xf32>
    %27 = math.exp %26 : vector<1x256xf32>
    %cst_13 = arith.constant 1.000000e+00 : f32
    %28 = vector.broadcast %cst_13 : f32 to vector<1x256xf32>
    %29 = arith.addf %28, %27 : vector<1x256xf32>
    %30 = arith.divf %28, %29 : vector<1x256xf32>
    %31 = vector.broadcast %20 : vector<4x1xf32> to vector<4x256xf32>
    %32 = vector.broadcast %30 : vector<1x256xf32> to vector<4x256xf32>
    %33 = arith.addf %31, %32 : vector<4x256xf32>
    %34 = arith.mulf %1, %33 : vector<4x256xf32>
    %c0_14 = arith.constant 0 : index
    %c0_15 = arith.constant 0 : index
    %c0_16 = arith.constant 0 : index
    %35 = vector.load %arg5[%c0_14, %c0_15, %c0_16] : memref<1x4x256xf32, #tpu.memory_space<vmem>>, vector<1x4x256xf32>
    %36 = vector.shape_cast %35 : vector<1x4x256xf32> to vector<4x256xf32>
    %37 = vector.shape_cast %34 : vector<4x256xf32> to vector<1x4x256xf32>
    tpu.vector_store %arg5[%c0_14, %c0_15, %c0_16], %37 {strides = array<i32>} : memref<1x4x256xf32, #tpu.memory_space<vmem>>, vector<1x4x256xf32>,
    return
  }
  func.func @transform_0(%arg0: i32) -> (i32, i32) {
    %c0_i32 = arith.constant 0 : i32
    %c0_i32_0 = arith.constant 0 : i32
    %c0_i32_1 = arith.constant 0 : i32
    return %c0_i32, %c0_i32_0 : i32, i32
  }
  func.func @transform_1(%arg0: i32) -> (i32, i32) {
    %c0_i32 = arith.constant 0 : i32
    %c0_i32_0 = arith.constant 0 : i32
    %c0_i32_1 = arith.constant 0 : i32
    return %c0_i32, %c0_i32_0 : i32, i32
  }
  func.func @transform_2(%arg0: i32) -> (i32, i32) {
    %c0_i32 = arith.constant 0 : i32
    %c0_i32_0 = arith.constant 0 : i32
    %c0_i32_1 = arith.constant 0 : i32
    return %c0_i32, %c0_i32_0 : i32, i32
  }
  func.func @transform_3(%arg0: i32) -> (i32, i32, i32) {
    %c0_i32 = arith.constant 0 : i32
    %c0_i32_0 = arith.constant 0 : i32
    %c0_i32_1 = arith.constant 0 : i32
    return %arg0, %c0_i32, %c0_i32_0 : i32, i32, i32
  }
  func.func @transform_4(%arg0: i32) -> (i32, i32, i32) {
    %c0_i32 = arith.constant 0 : i32
    %c0_i32_0 = arith.constant 0 : i32
    %c0_i32_1 = arith.constant 0 : i32
    return %arg0, %c0_i32, %c0_i32_0 : i32, i32, i32
  }
}

</mosaic_0001>

<llo_original>
// kernel: scse_forward.1
$region0: #{scse_forward.1}
  #allocation0 [shape = 'u32[]', space=smem, size = 0x4, offset = 0x4, fixed_abs, tag = 'smem constant byte address 0x4 - core index']
  #allocation1 [shape = 'u32[144,128]{1,0:T(1,128)}', space=vmem, size = 0x12000, scoped, tag = 'internal scratch']
  %s0 = inlined_call_operand.vmem [shape: f32[4,1], index: 0, kind: input, shape index: {}]
  %s1 = inlined_call_operand.vmem [shape: f32[4,2], index: 1, kind: input, shape index: {}]
  %s2 = inlined_call_operand.vmem [shape: f32[4,2], index: 2, kind: input, shape index: {}]
  %s3 = inlined_call_operand.vmem [shape: f32[2,4,256], index: 3, kind: input, shape index: {}]
  %s4 = inlined_call_operand.vmem [shape: f32[2,4,256], index: 4, kind: output, shape index: {}]
  %s5 = sld [smem:[#allocation0]]
  $region49: #{scse_forward.1} parent=0
    _
  %s7 = ssub.s32 1, %s5
  %s8 = scalar_select 0, %s7, %s5
  loop: start=0, step=1, limit=4
  $region2: #{scse_forward.1} parent=0 // loop_pre_header
    _
  $region3: #{scse_forward.1} parent=0 // loop_header
    %s10 = sphi 0, %s14
    %p11 = scmp.ge.s32.totalorder %s10, 4
    %s18 = sphi 0, %s18
    %s20 = sphi 0, %s18
    %s21 = sphi 0, %s20
    %s35 = sphi 0, %s21
    %s39 = sphi 0, %s39
    %s41 = sphi 0, %s39
    %s42 = sphi 0, %s41
    %s56 = sphi 0, %s42
    %s60 = sphi 0, %s60
    %s62 = sphi 0, %s60
    %s63 = sphi 0, %s62
    %s77 = sphi 0, %s63
    %s83 = sphi 0, %s85
    %s86 = sphi 0, %s83
    %s87 = sphi 0, %s86
    %s103 = sphi 0, %s87
    %s109 = sphi 0, %s111
    %s112 = sphi 0, %s109
    %s113 = sphi 0, %s112
    %s129 = sphi 0, %s113
  $region4: #{scse_forward.1} parent=0 // loop_header_branch
    %13 = sbr.rel (%p11) target = $region8
  $region5: #{scse_forward.1} parent=0 // loop_body
    %s15 = ssub.s32 %s10, 1
    %s16 = ssub.s32 %s10, 2
    %s17 = sadd.s32 %s10, 1
    %s19 = sadd.s32 %s18, 1
    %p22 = scmp.eq.s32.totalorder %s10, 1
    %p23 = scmp.ne.s32.totalorder %s18, %s20
    %p24 = scmp.eq.s32.totalorder %s10, 0
    %p25 = por %p23, %p24
    %p26 = scmp.ne.s32.totalorder %s18, %s20
    %p27 = scmp.eq.s32.totalorder %s15, 1
    %p28 = por %p26, %p27
    %p29 = scmp.ne.s32.totalorder %s20, %s21
    %p30 = scmp.eq.s32.totalorder %s15, 0
    %p31 = por %p29, %p30
    %p32 = scmp.ne.s32.totalorder %s20, %s21
    %p33 = scmp.eq.s32.totalorder %s16, 1
    %p34 = por %p32, %p33
    %p36 = scmp.ne.s32.totalorder %s21, %s35
    %p37 = scmp.eq.s32.totalorder %s16, 0
    %p38 = por %p36, %p37
    %s40 = sadd.s32 %s39, 1
    %p43 = scmp.eq.s32.totalorder %s10, 1
    %p44 = scmp.ne.s32.totalorder %s39, %s41
    %p45 = scmp.eq.s32.totalorder %s10, 0
    %p46 = por %p44, %p45
    %p47 = scmp.ne.s32.totalorder %s39, %s41
    %p48 = scmp.eq.s32.totalorder %s15, 1
    %p49 = por %p47, %p48
    %p50 = scmp.ne.s32.totalorder %s41, %s42
    %p51 = scmp.eq.s32.totalorder %s15, 0
    %p52 = por %p50, %p51
    %p53 = scmp.ne.s32.totalorder %s41, %s42
    %p54 = scmp.eq.s32.totalorder %s16, 1
    %p55 = por %p53, %p54
    %p57 = scmp.ne.s32.totalorder %s42, %s56
    %p58 = scmp.eq.s32.totalorder %s16, 0
    %p59 = por %p57, %p58
    %s61 = sadd.s32 %s60, 1
    %p64 = scmp.eq.s32.totalorder %s10, 1
    %p65 = scmp.ne.s32.totalorder %s60, %s62
    %p66 = scmp.eq.s32.totalorder %s10, 0
    %p67 = por %p65, %p66
    %p68 = scmp.ne.s32.totalorder %s60, %s62
    %p69 = scmp.eq.s32.totalorder %s15, 1
    %p70 = por %p68, %p69
    %p71 = scmp.ne.s32.totalorder %s62, %s63
    %p72 = scmp.eq.s32.totalorder %s15, 0
    %p73 = por %p71, %p72
    %p74 = scmp.ne.s32.totalorder %s62, %s63
    %p75 = scmp.eq.s32.totalorder %s16, 1
    %p76 = por %p74, %p75
    %p78 = scmp.ne.s32.totalorder %s63, %s77
    %p79 = scmp.eq.s32.totalorder %s16, 0
    %p80 = por %p78, %p79
    %s81 = ssub.s32 %s10, %s17
    %p82 = scmp.eq.s32.totalorder %s81, 0
    %s84 = sadd.s32 %s83, 1
    %s85 = scalar_select %p82, %s83, %s84
    %p88 = pneg %p82
    %p89 = scmp.eq.s32.totalorder %s10, 1
    %p90 = por %p88, %p89
    %p91 = scmp.ne.s32.totalorder %s83, %s86
    %p92 = scmp.eq.s32.totalorder %s10, 0
    %p93 = por %p91, %p92
    %p94 = scmp.ne.s32.totalorder %s83, %s86
    %p95 = scmp.eq.s32.totalorder %s15, 1
    %p96 = por %p94, %p95
    %p97 = scmp.ne.s32.totalorder %s86, %s87
    %p98 = scmp.eq.s32.totalorder %s15, 0
    %p99 = por %p97, %p98
    %p100 = scmp.ne.s32.totalorder %s86, %s87
    %p101 = scmp.eq.s32.totalorder %s16, 1
    %p102 = por %p100, %p101
    %p104 = scmp.ne.s32.totalorder %s87, %s103
    %p105 = scmp.eq.s32.totalorder %s16, 0
    %p106 = por %p104, %p105
    %s107 = ssub.s32 %s10, %s17
    %p108 = scmp.eq.s32.totalorder %s107, 0
    %s110 = sadd.s32 %s109, 1
    %s111 = scalar_select %p108, %s109, %s110
    %p114 = pneg %p108
    %p115 = scmp.eq.s32.totalorder %s10, 1
    %p116 = por %p114, %p115
    %p117 = scmp.ne.s32.totalorder %s109, %s112
    %p118 = scmp.eq.s32.totalorder %s10, 0
    %p119 = por %p117, %p118
    %p120 = scmp.ne.s32.totalorder %s109, %s112
    %p121 = scmp.eq.s32.totalorder %s15, 1
    %p122 = por %p120, %p121
    %p123 = scmp.ne.s32.totalorder %s112, %s113
    %p124 = scmp.eq.s32.totalorder %s15, 0
    %p125 = por %p123, %p124
    %p126 = scmp.ne.s32.totalorder %s112, %s113
    %p127 = scmp.eq.s32.totalorder %s16, 1
    %p128 = por %p126, %p127
    %p130 = scmp.ne.s32.totalorder %s113, %s129
    %p131 = scmp.eq.s32.totalorder %s16, 0
    %p132 = por %p130, %p131
    %p133 = scmp.le.s32.totalorder 1, %s10
    %p134 = scmp.lt.s32.totalorder %s10, 3
    %p135 = pnand %p133, %p134
    %p136 = pneg %p135
    // Predicated region
    $region9: #{scse_forward.1} parent=5 // pred_check
      _
    $region10: #{scse_forward.1} parent=5 // pred_check_branch
      %138 = sbr.rel (%p135) target = $region12
    $region11: #{scse_forward.1} parent=5 // pred_region
      %s139 = ssub.s32 %s10, 1
      // Predicated region
      $region13: #{scse_forward.1} parent=11 // pred_check
        %p140 = pneg %p31
      $region14: #{scse_forward.1} parent=11 // pred_check_branch
        %142 = sbr.rel (%p140) target = $region16
      $region15: #{scse_forward.1} parent=11 // pred_region
        _
      $region16: #{scse_forward.1} parent=11 // pred_fallthru
        _
      // Predicated region
      $region17: #{scse_forward.1} parent=11 // pred_check
        %p143 = pneg %p52
      $region18: #{scse_forward.1} parent=11 // pred_check_branch
        %145 = sbr.rel (%p143) target = $region20
      $region19: #{scse_forward.1} parent=11 // pred_region
        _
      $region20: #{scse_forward.1} parent=11 // pred_fallthru
        _
      // Predicated region
      $region21: #{scse_forward.1} parent=11 // pred_check
        %p146 = pneg %p73
      $region22: #{scse_forward.1} parent=11 // pred_check_branch
        %148 = sbr.rel (%p146) target = $region24
      $region23: #{scse_forward.1} parent=11 // pred_region
        _
      $region24: #{scse_forward.1} parent=11 // pred_fallthru
        _
    $region12: #{scse_forward.1} parent=5 // pred_fallthru
      _
    %p149 = scmp.lt.s32.totalorder %s10, 2
    // Predicated region
    $region25: #{scse_forward.1} parent=5 // pred_check
      %p150 = pneg %p149
    $region26: #{scse_forward.1} parent=5 // pred_check_branch
      %152 = sbr.rel (%p150) target = $region28
    $region27: #{scse_forward.1} parent=5 // pred_region
      // Predicated region
      $region29: #{scse_forward.1} parent=27 // pred_check
        %p153 = pneg %p93
      $region30: #{scse_forward.1} parent=27 // pred_check_branch
        %155 = sbr.rel (%p153) target = $region32
      $region31: #{scse_forward.1} parent=27 // pred_region
        %p156 = scmp.lt.s32.totalorder %s10, 1
        %s157 = scalar_select %p156, %s10, 1
        %s158 = smul.addr %s157, 2
        %s159 = smul.addr %s158, 4
        %s160 = scalar_lea.vmem %s3, %s159
      $region32: #{scse_forward.1} parent=27 // pred_fallthru
        _
    $region28: #{scse_forward.1} parent=5 // pred_fallthru
      _
    %p161 = scmp.le.s32.totalorder 1, %s10
    %p162 = scmp.lt.s32.totalorder %s10, 3
    %p163 = pnand %p161, %p162
    %p164 = pneg %p163
    // Predicated region
    $region33: #{scse_forward.1} parent=5 // pred_check
      _
    $region34: #{scse_forward.1} parent=5 // pred_check_branch
      %166 = sbr.rel (%p163) target = $region36
    $region35: #{scse_forward.1} parent=5 // pred_region
      %s167 = ssub.s32 %s10, 1
      %p168 = pneg %p31
      %p169 = pneg %p28
      %p170 = pneg %p52
      %p171 = pneg %p49
      %p172 = pneg %p73
      %p173 = pneg %p70
      %p174 = scmp.lt.s32.totalorder %s15, 1
      %s175 = scalar_select %p174, %s15, 1
      %s176 = smul.addr %s175, 2
      %s177 = smul.addr %s176, 4
      %s178 = scalar_lea.vmem %s3, %s177
      %p179 = pneg %p99
      %p180 = pneg %p96
      %p181 = pneg %p125
      %p182 = pneg %p122
      %p183 = scmp.lt.s32.totalorder %s15, 1
      %s184 = scalar_select %p183, %s15, 1
      %s185 = smul.addr %s184, 2
      %s186 = smul.addr %s185, 4
      %s187 = scalar_lea.vmem %s4, %s186
      %p188 = scmp.lt.s32.totalorder %s15, 1
      %s189 = scalar_select %p188, %s15, 1
      %s190 = smul.addr %s189, 2
      %s191 = smul.addr %s190, 4
      %s192 = scalar_lea.vmem %s3, %s191
      %p193 = scmp.lt.s32.totalorder %s15, 1
      %s194 = scalar_select %p193, %s15, 1
      %s195 = smul.addr %s194, 2
      %s196 = smul.addr %s195, 4
      %s197 = scalar_lea.vmem %s4, %s196
      %v198 = vld [vmem:[%s192] sm:$0xff]
      %v200 = vcombine.high %v198, %v198
      %vm202 = vcmask 1043456
      %v203 = vsel %vm202, %v198, 0.0
      %v204 = vsel %vm202, %v200, 0.0
      %v205 = vadd.f32 %v203, %v204
      %206 = vadd.xlane.f32.xlu0 %v205
      %v207 = vpop.xlane.xlu0 %206
      %v208 = vrcp.pop 256.0
      %v209 = vmul.f32 %v207, %v208
      %v210 = vld [vmem:[%s1] sm:$0xf]
      %v211 = vmul.f32 %v210, %v209
      %vm212 = vcmask 11264
      %v213 = vsel %vm212, %v211, 0.0
      %v214 = vrot.slane %v213, 4
      %v215 = vadd.f32 %v213, %v214
      %v216 = vrot.slane %v215, 2
      %v217 = vadd.f32 %v215, %v216
      %v218 = vrot.slane %v217, 1
      %v219 = vadd.f32 %v217, %v218
      %v220 = vld [vmem:[%s2] sm:$0xf]
      %v221 = vmul.f32 %v220, %v219
      %v222 = vsel %vm212, %v221, 0.0
      %223 = vadd.xlane.f32.xlu0 %v222
      %v224 = vpop.xlane.xlu0 %223
      %v225 = vxor.u32 %v224, 2147483648
      %v226 = vmul.f32 %v225, 1.442695
      %v227 = vpow.pop %v226
      %v228 = vadd.f32 %v227, 1.0
      %v229 = vrcp.pop %v228
      %v230 = vmul.f32 1.0, %v229
      %v231 = vld [vmem:[%s0] sm:$0xf]
      %233 = vset.pattern.permute.xlu0 0
      %234 = vperm.xlu0 %233, %v231
      %v235 = vpop.permute.xlu0 %234
      %v237 = vunpack.c.l.s4 839922192
      %v238 = vunpack.c.0.s8 %v237
      %v239 = vlaneseq
      %v240 = vshrl.u32 %v239, 7
      %v241 = vsub.s32 %v238, %v240
      %v242 = vrot.slane %v235, %v241
      %v244 = vmul.f32 %v198, %v242
      %v246 = vcombine.high %v244, %v244
      %v248 = vsel %vm202, %v244, 0.0
      %v249 = vrot.slane %v248, 4
      %v250 = vadd.f32 %v248, %v249
      %v251 = vrot.slane %v250, 2
      %v252 = vadd.f32 %v250, %v251
      %v253 = vrot.slane %v252, 1
      %v254 = vadd.f32 %v252, %v253
      %v255 = vsel %vm202, %v246, 0.0
      %v256 = vrot.slane %v255, 4
      %v257 = vadd.f32 %v255, %v256
      %v258 = vrot.slane %v257, 2
      %v259 = vadd.f32 %v257, %v258
      %v260 = vrot.slane %v259, 1
      %v261 = vadd.f32 %v259, %v260
      %v262 = vxor.u32 %v254, 2147483648
      %v263 = vxor.u32 %v261, 2147483648
      %v264 = vmul.f32 %v262, 1.442695
      %v265 = vpow.pop %v264
      %v266 = vmul.f32 %v263, 1.442695
      %v267 = vpow.pop %v266
      %v268 = vadd.f32 %v265, 1.0
      %v269 = vadd.f32 %v267, 1.0
      %v270 = vrcp.pop %v268
      %v271 = vmul.f32 1.0, %v270
      %v272 = vrcp.pop %v269
      %v273 = vmul.f32 1.0, %v272
      %v274 = vadd.f32 %v230, %v271
      %v275 = vadd.f32 %v230, %v273
      %v278 = vcombine.low %v274, %v275
      %v280 = vmul.f32 %v198, %v278
      %281 = vst [vmem:[%s197] sm:$0xff] %v280
      %p282 = scmp.lt.s32.totalorder %s15, 1
      %s283 = scalar_select %p282, %s15, 1
      %s284 = smul.addr %s283, 2
      %s285 = smul.addr %s284, 4
      %s286 = scalar_lea.vmem %s4, %s285
      // Predicated region
      $region37: #{scse_forward.1} parent=35 // pred_check
        %p287 = pneg %p122
      $region38: #{scse_forward.1} parent=35 // pred_check_branch
        %289 = sbr.rel (%p287) target = $region40
      $region39: #{scse_forward.1} parent=35 // pred_region
        _
      $region40: #{scse_forward.1} parent=35 // pred_fallthru
        _
    $region36: #{scse_forward.1} parent=5 // pred_fallthru
      _
    %p290 = scmp.le.s32.totalorder 2, %s10
    // Predicated region
    $region41: #{scse_forward.1} parent=5 // pred_check
      %p291 = pneg %p290
    $region42: #{scse_forward.1} parent=5 // pred_check_branch
      %293 = sbr.rel (%p291) target = $region44
    $region43: #{scse_forward.1} parent=5 // pred_region
      %s294 = ssub.s32 %s10, 2
      // Predicated region
      $region45: #{scse_forward.1} parent=43 // pred_check
        %p295 = pneg %p128
      $region46: #{scse_forward.1} parent=43 // pred_check_branch
        %297 = sbr.rel (%p295) target = $region48
      $region47: #{scse_forward.1} parent=43 // pred_region
        %p298 = scmp.lt.s32.totalorder %s16, 1
        %s299 = scalar_select %p298, %s16, 1
        %s300 = smul.addr %s299, 2
        %s301 = smul.addr %s300, 4
        %s302 = scalar_lea.vmem %s4, %s301
      $region48: #{scse_forward.1} parent=43 // pred_fallthru
        _
    $region44: #{scse_forward.1} parent=5 // pred_fallthru
      _
  $region6: #{scse_forward.1} parent=0 // loop_footer
    %s14 = sadd.s32 1, %s10
  $region7: #{scse_forward.1} parent=0 // loop_footer_branch
    %9 = sbr.rel target = $region3
  $region8: #{scse_forward.1} parent=0 // loop_exit
    _

</llo_original>
